<compile_context>
chip_gen: v5e
topology: v5e:2x2
jax: 0.10.0
libtpu: 0.0.40
codegen_flags: <defaults>
</compile_context>

<pallas_src>
import functools

import jax
import jax.numpy as jnp
from jax.experimental import pallas as pl
from jax.experimental.pallas import tpu as pltpu

BN_EPS = 1e-5
MAX_TILE_N = 8192                 # batch-tile width on the lane axis (multiple of 128)
SPLIT_THRESHOLD = 2048            # keep >=2 grid steps above this (v7x megacore)
VMEM_LIMIT_BYTES = 32 * 1024 * 1024


def _round_up(a, b):
    return (a + b - 1) // b * b


def _cdiv(a, b):
    return (a + b - 1) // b


def _tiling(n):
    """Pick (num_tiles, tile_n, n_pad): lane-axis tiles, padding bounded by
    ~num_tiles*128 rows, and >=2 grid steps when there is enough work."""
    n128 = _round_up(max(n, 1), 128)
    num_tiles = _cdiv(n128, MAX_TILE_N)
    if num_tiles == 1 and n128 >= SPLIT_THRESHOLD:
        num_tiles = 2
    tile_n = _round_up(_cdiv(n128, num_tiles), 128)
    n_pad = num_tiles * tile_n
    return num_tiles, tile_n, n_pad


def _hidden(x_ref, w3t_ref, b3_ref):
    # fc3 -> ReLU on the MXU: [8, latent] @ [latent, T] + [8, 1] -> [8, T]
    h = jnp.dot(w3t_ref[...], x_ref[...],
                preferred_element_type=jnp.float32,
                precision=jax.lax.Precision.HIGHEST)
    return jnp.maximum(h + b3_ref[...], 0.0)


def _stats_kernel(x_ref, w3t_ref, b3_ref, sum_ref, ssq_ref):
    # Pass 1: per-tile partial sum / sum-of-squares of ReLU(fc3(x)).
    # Per-tile partial outputs keep the grid axis "parallel" (no resident
    # accumulator), so both TensorCores on v7x can work on it.
    h = _hidden(x_ref, w3t_ref, b3_ref)
    sum_ref[...] = jnp.sum(h, axis=1, keepdims=True)[None]
    ssq_ref[...] = jnp.sum(h * h, axis=1, keepdims=True)[None]


def _apply_kernel(x_ref, w3t_ref, b3_ref, scale_ref, shift_ref,
                  w4t_ref, b4_ref, out_ref, *, out_dim):
    # Pass 2: fc3 -> ReLU -> BN (folded scale/shift) -> fc4 -> ReLU, then a
    # per-tile XLU transpose so the HBM writeback is a contiguous
    # (tile_n, out_dim) block and the wrapper needs no transpose.
    h = _hidden(x_ref, w3t_ref, b3_ref)
    h = h * scale_ref[...] + shift_ref[...]
    y = jnp.dot(w4t_ref[...], h,
                preferred_element_type=jnp.float32,
                precision=jax.lax.Precision.HIGHEST)
    y = jnp.maximum(y + b4_ref[...], 0.0)            # [16, T]; rows >= out_dim are 0
    out_ref[...] = y.T[:, :out_dim].astype(out_ref.dtype)


@jax.jit
def decoder_forward(x, params):
    """x: [N, latent_size] float32 -> [N, 12] float32 (train-mode BatchNorm)."""
    w3t, b3, gamma, beta, w4t, b4 = params
    n, latent = x.shape
    h_dim = w3t.shape[0]              # 8
    out_dim = w4t.shape[0]            # 12
    out_pad = _round_up(out_dim, 8)   # 16: sublane-aligned fc4 output rows

    num_tiles, tile_n, n_pad = _tiling(n)
    grid = (num_tiles,)

    # Pad the batch first, then transpose (fuses into one XLA copy) into the
    # lane-dense [latent, n_pad] layout consumed by both kernels.
    x = jnp.asarray(x, jnp.float32)
    if n_pad != n:
        x = jnp.pad(x, ((0, n_pad - n), (0, 0)))
    x_t = x.T

    # fc4 parameters padded to 16 rows (padded rows are zero -> zero output
    # rows, which the (tile_n, out_dim) output block never stores).
    w4t_p = jnp.pad(w4t, ((0, out_pad - out_dim), (0, 0)))
    b4_p = jnp.pad(b4, ((0, out_pad - out_dim), (0, 0)))

    full = lambda shape: pl.BlockSpec(shape, lambda i: (0, 0))   # resident params
    x_spec = pl.BlockSpec((latent, tile_n), lambda i: (0, i))

    # ---------- pass 1: per-tile batch statistics of ReLU(fc3(x)) ----------
    part_sum, part_ssq = pl.pallas_call(
        _stats_kernel,
        grid=grid,
        in_specs=[x_spec, full((h_dim, latent)), full((h_dim, 1))],
        out_specs=(pl.BlockSpec((1, h_dim, 1), lambda i: (i, 0, 0)),
                   pl.BlockSpec((1, h_dim, 1), lambda i: (i, 0, 0))),
        out_shape=(jax.ShapeDtypeStruct((num_tiles, h_dim, 1), jnp.float32),
                   jax.ShapeDtypeStruct((num_tiles, h_dim, 1), jnp.float32)),
        compiler_params=pltpu.CompilerParams(
            dimension_semantics=("parallel",),
            vmem_limit_bytes=VMEM_LIMIT_BYTES),
    )(x_t, w3t, b3)

    # Zero-padded batch rows each contribute relu(b3) to the sum and
    # relu(b3)^2 to the sum of squares: subtract analytically (no in-kernel
    # mask).  NOTE: E[x^2]-E[x]^2 in f32 is adequate at these magnitudes; for
    # huge batches switch to a centered second pass.
    n_zero = n_pad - n
    relu_b3 = jnp.maximum(b3, 0.0)
    h_sum = jnp.sum(part_sum[:, :, 0], axis=0)[:, None] - n_zero * relu_b3
    h_ssq = jnp.sum(part_ssq[:, :, 0], axis=0)[:, None] - n_zero * relu_b3 * relu_b3

    # Fold train-mode BatchNorm (batch mean, biased variance) into a
    # per-feature scale/shift.  Only 8 floats of work -> plain JAX.
    mean = h_sum / n
    var = jnp.maximum(h_ssq / n - mean * mean, 0.0)
    inv_std = jax.lax.rsqrt(var + BN_EPS)
    scale = gamma * inv_std
    shift = beta - mean * scale

    # ---------- pass 2: fc3 -> ReLU -> BN(scale,shift) -> fc4 -> ReLU ----------
    out = pl.pallas_call(
        functools.partial(_apply_kernel, out_dim=out_dim),
        grid=grid,
        in_specs=[x_spec,
                  full((h_dim, latent)), full((h_dim, 1)),
                  full((h_dim, 1)), full((h_dim, 1)),
                  full((out_pad, h_dim)), full((out_pad, 1))],
        out_specs=pl.BlockSpec((tile_n, out_dim), lambda i: (i, 0)),
        out_shape=jax.ShapeDtypeStruct((n_pad, out_dim), jnp.float32),
        compiler_params=pltpu.CompilerParams(
            dimension_semantics=("parallel",),
            vmem_limit_bytes=VMEM_LIMIT_BYTES),
    )(x_t, w3t, b3, scale, shift, w4t_p, b4_p)

    return out[:n]


def init_params(key, latent_size):
    """Deterministic init mirroring nn.Linear defaults (uniform +-1/sqrt(fan_in)).

    Weights are stored in PyTorch [out, in] layout; biases/gamma/beta as
    [out, 1] columns (what the lane-dense kernels consume directly).
    """
    k3w, k3b, k4w, k4b = jax.random.split(key, 4)

    bound3 = 1.0 / jnp.sqrt(float(latent_size))
    w3t = jax.random.uniform(k3w, (8, latent_size), jnp.float32, -bound3, bound3)
    b3 = jax.random.uniform(k3b, (8, 1), jnp.float32, -bound3, bound3)

    gamma = jnp.ones((8, 1), jnp.float32)    # BatchNorm1d weight init
    beta = jnp.zeros((8, 1), jnp.float32)    # BatchNorm1d bias init

    bound4 = 1.0 / jnp.sqrt(8.0)
    w4t = jax.random.uniform(k4w, (12, 8), jnp.float32, -bound4, bound4)
    b4 = jax.random.uniform(k4b, (12, 1), jnp.float32, -bound4, bound4)

    return (w3t, b3, gamma, beta, w4t, b4)


def decoder_ref(x, params):
    """Pure-JAX reference (PyTorch [N, F] convention) for correctness checks."""
    w3t, b3, gamma, beta, w4t, b4 = params
    h = jnp.maximum(x @ w3t.T + b3[:, 0], 0.0)
    mean = jnp.mean(h, axis=0, keepdims=True)
    var = jnp.mean((h - mean) ** 2, axis=0, keepdims=True)
    h = (h - mean) / jnp.sqrt(var + BN_EPS) * gamma[:, 0] + beta[:, 0]
    return jnp.maximum(h @ w4t.T + b4[:, 0], 0.0)


if __name__ == "__main__":
    latent_size = 4

    key = jax.random.PRNGKey(0)
    k_x1, k_x2, k_p = jax.random.split(key, 3)
    params = init_params(k_p, latent_size)

    # Small case: single 128-lane tile; 120 zero-padded batch rows exercise the
    # analytic padding correction of the BatchNorm statistics.
    x_small = jax.random.normal(k_x1, (8, latent_size), jnp.float32)
    out_small = jax.block_until_ready(decoder_forward(x_small, params))
    ref_small = decoder_ref(x_small, params)
    assert out_small.shape == (8, 12)
    assert jnp.allclose(out_small, ref_small, atol=2e-3, rtol=2e-3)

    # Multi-tile case: 2560 rows -> 2 tiles of 1280 lanes (zero padding);
    # exercises the per-tile partial-sum reduction and the parallel pass 2.
    x_big = jax.random.normal(k_x2, (2560, latent_size), jnp.float32)
    out_big = jax.block_until_ready(decoder_forward(x_big, params))
    ref_big = decoder_ref(x_big, params)
    assert out_big.shape == (2560, 12)
    assert jnp.allclose(out_big, ref_big, atol=2e-3, rtol=2e-3)

    print("KERNEL_OK")
</pallas_src>

<mosaic_0001>
module attributes {stable_mosaic.version = 11 : i64} {
  func.func @_stats_kernel(%arg0: i32, %arg1: memref<4x128xf32, #tpu.memory_space<vmem>>, %arg2: memref<8x4xf32, #tpu.memory_space<vmem>>, %arg3: memref<8x1xf32, #tpu.memory_space<vmem>>, %arg4: memref<1x8x1xf32, #tpu.memory_space<vmem>>, %arg5: memref<1x8x1xf32, #tpu.memory_space<vmem>>) attributes {dimension_semantics = [#tpu.dimension_semantics<parallel>], iteration_bounds = array<i64: 1>, scalar_prefetch = 0 : i64, scratch_operands = 0 : i64, tpu.core_type = #tpu.core_type<tc>, window_params = [{transform_indices = @transform_0, window_bounds = array<i64: 4, 128>}, {pipeline_mode = #tpu.pipeline_mode<synchronous>, transform_indices = @transform_1, window_bounds = array<i64: 8, 4>}, {pipeline_mode = #tpu.pipeline_mode<synchronous>, transform_indices = @transform_2, window_bounds = array<i64: 8, 1>}, {transform_indices = @transform_3, window_bounds = array<i64: 1, 8, 1>}, {transform_indices = @transform_4, window_bounds = array<i64: 1, 8, 1>}]} {
    %c0 = arith.constant 0 : index
    %c0_0 = arith.constant 0 : index
    %0 = vector.load %arg2[%c0, %c0_0] : memref<8x4xf32, #tpu.memory_space<vmem>>, vector<8x4xf32>
    %c0_1 = arith.constant 0 : index
    %c0_2 = arith.constant 0 : index
    %1 = vector.load %arg1[%c0_1, %c0_2] : memref<4x128xf32, #tpu.memory_space<vmem>>, vector<4x128xf32>
    %cst = arith.constant dense<0.000000e+00> : vector<8x128xf32>
    %2 = tpu.matmul %0, %1, %cst {dimension_numbers = #tpu.dot_dimension_numbers<[1], [0], [0], [1], [0, 0, 1, 1], [], []>, precision = #tpu.contract_precision<fp32>} : vector<8x4xf32>, vector<4x128xf32>, vector<8x128xf32> -> vector<8x128xf32>
    %c0_3 = arith.constant 0 : index
    %c0_4 = arith.constant 0 : index
    %3 = vector.load %arg3[%c0_3, %c0_4] : memref<8x1xf32, #tpu.memory_space<vmem>>, vector<8x1xf32>
    %4 = vector.broadcast %3 : vector<8x1xf32> to vector<8x128xf32>
    %5 = arith.addf %2, %4 : vector<8x128xf32>
    %cst_5 = arith.constant 0.000000e+00 : f32
    %6 = vector.broadcast %cst_5 : f32 to vector<8x128xf32>
    %7 = arith.maximumf %5, %6 : vector<8x128xf32>
    %cst_6 = arith.constant dense<0.000000e+00> : vector<8xf32>
    %8 = vector.multi_reduction <add>, %7, %cst_6 [1] : vector<8x128xf32> to vector<8xf32>
    %9 = vector.shape_cast %8 : vector<8xf32> to vector<8x1xf32>
    %10 = vector.shape_cast %9 : vector<8x1xf32> to vector<1x8x1xf32>
    %c0_7 = arith.constant 0 : index
    %c0_8 = arith.constant 0 : index
    %c0_9 = arith.constant 0 : index
    %11 = vector.load %arg4[%c0_7, %c0_8, %c0_9] : memref<1x8x1xf32, #tpu.memory_space<vmem>>, vector<1x8x1xf32>
    tpu.vector_store %arg4[%c0_7, %c0_8, %c0_9], %10 {strides = array<i32>} : memref<1x8x1xf32, #tpu.memory_space<vmem>>, vector<1x8x1xf32>,
    %12 = arith.mulf %7, %7 : vector<8x128xf32>
    %cst_10 = arith.constant dense<0.000000e+00> : vector<8xf32>
    %13 = vector.multi_reduction <add>, %12, %cst_10 [1] : vector<8x128xf32> to vector<8xf32>
    %14 = vector.shape_cast %13 : vector<8xf32> to vector<8x1xf32>
    %15 = vector.shape_cast %14 : vector<8x1xf32> to vector<1x8x1xf32>
    %c0_11 = arith.constant 0 : index
    %c0_12 = arith.constant 0 : index
    %c0_13 = arith.constant 0 : index
    %16 = vector.load %arg5[%c0_11, %c0_12, %c0_13] : memref<1x8x1xf32, #tpu.memory_space<vmem>>, vector<1x8x1xf32>
    tpu.vector_store %arg5[%c0_11, %c0_12, %c0_13], %15 {strides = array<i32>} : memref<1x8x1xf32, #tpu.memory_space<vmem>>, vector<1x8x1xf32>,
    return
  }
  func.func @transform_0(%arg0: i32) -> (i32, i32) {
    %c0_i32 = arith.constant 0 : i32
    %c0_i32_0 = arith.constant 0 : i32
    return %c0_i32, %arg0 : i32, i32
  }
  func.func @transform_1(%arg0: i32) -> (i32, i32) {
    %c0_i32 = arith.constant 0 : i32
    %c0_i32_0 = arith.constant 0 : i32
    %c0_i32_1 = arith.constant 0 : i32
    return %c0_i32, %c0_i32_0 : i32, i32
  }
  func.func @transform_2(%arg0: i32) -> (i32, i32) {
    %c0_i32 = arith.constant 0 : i32
    %c0_i32_0 = arith.constant 0 : i32
    %c0_i32_1 = arith.constant 0 : i32
    return %c0_i32, %c0_i32_0 : i32, i32
  }
  func.func @transform_3(%arg0: i32) -> (i32, i32, i32) {
    %c0_i32 = arith.constant 0 : i32
    %c0_i32_0 = arith.constant 0 : i32
    %c0_i32_1 = arith.constant 0 : i32
    return %arg0, %c0_i32, %c0_i32_0 : i32, i32, i32
  }
  func.func @transform_4(%arg0: i32) -> (i32, i32, i32) {
    %c0_i32 = arith.constant 0 : i32
    %c0_i32_0 = arith.constant 0 : i32
    %c0_i32_1 = arith.constant 0 : i32
    return %arg0, %c0_i32, %c0_i32_0 : i32, i32, i32
  }
}

module attributes {stable_mosaic.version = 11 : i64} {
  func.func @_apply_kernel(%arg0: i32, %arg1: memref<4x128xf32, #tpu.memory_space<vmem>>, %arg2: memref<8x4xf32, #tpu.memory_space<vmem>>, %arg3: memref<8x1xf32, #tpu.memory_space<vmem>>, %arg4: memref<8x1xf32, #tpu.memory_space<vmem>>, %arg5: memref<8x1xf32, #tpu.memory_space<vmem>>, %arg6: memref<16x8xf32, #tpu.memory_space<vmem>>, %arg7: memref<16x1xf32, #tpu.memory_space<vmem>>, %arg8: memref<128x12xf32, #tpu.memory_space<vmem>>) attributes {dimension_semantics = [#tpu.dimension_semantics<parallel>], iteration_bounds = array<i64: 1>, scalar_prefetch = 0 : i64, scratch_operands = 0 : i64, tpu.core_type = #tpu.core_type<tc>, window_params = [{transform_indices = @transform_0, window_bounds = array<i64: 4, 128>}, {pipeline_mode = #tpu.pipeline_mode<synchronous>, transform_indices = @transform_1, window_bounds = array<i64: 8, 4>}, {pipeline_mode = #tpu.pipeline_mode<synchronous>, transform_indices = @transform_2, window_bounds = array<i64: 8, 1>}, {pipeline_mode = #tpu.pipeline_mode<synchronous>, transform_indices = @transform_3, window_bounds = array<i64: 8, 1>}, {pipeline_mode = #tpu.pipeline_mode<synchronous>, transform_indices = @transform_4, window_bounds = array<i64: 8, 1>}, {pipeline_mode = #tpu.pipeline_mode<synchronous>, transform_indices = @transform_5, window_bounds = array<i64: 16, 8>}, {pipeline_mode = #tpu.pipeline_mode<synchronous>, transform_indices = @transform_6, window_bounds = array<i64: 16, 1>}, {transform_indices = @transform_7, window_bounds = array<i64: 128, 12>}]} {
    %c0 = arith.constant 0 : index
    %c0_0 = arith.constant 0 : index
    %0 = vector.load %arg2[%c0, %c0_0] : memref<8x4xf32, #tpu.memory_space<vmem>>, vector<8x4xf32>
    %c0_1 = arith.constant 0 : index
    %c0_2 = arith.constant 0 : index
    %1 = vector.load %arg1[%c0_1, %c0_2] : memref<4x128xf32, #tpu.memory_space<vmem>>, vector<4x128xf32>
    %cst = arith.constant dense<0.000000e+00> : vector<8x128xf32>
    %2 = tpu.matmul %0, %1, %cst {dimension_numbers = #tpu.dot_dimension_numbers<[1], [0], [0], [1], [0, 0, 1, 1], [], []>, precision = #tpu.contract_precision<fp32>} : vector<8x4xf32>, vector<4x128xf32>, vector<8x128xf32> -> vector<8x128xf32>
    %c0_3 = arith.constant 0 : index
    %c0_4 = arith.constant 0 : index
    %3 = vector.load %arg3[%c0_3, %c0_4] : memref<8x1xf32, #tpu.memory_space<vmem>>, vector<8x1xf32>
    %4 = vector.broadcast %3 : vector<8x1xf32> to vector<8x128xf32>
    %5 = arith.addf %2, %4 : vector<8x128xf32>
    %cst_5 = arith.constant 0.000000e+00 : f32
    %6 = vector.broadcast %cst_5 : f32 to vector<8x128xf32>
    %7 = arith.maximumf %5, %6 : vector<8x128xf32>
    %c0_6 = arith.constant 0 : index
    %c0_7 = arith.constant 0 : index
    %8 = vector.load %arg4[%c0_6, %c0_7] : memref<8x1xf32, #tpu.memory_space<vmem>>, vector<8x1xf32>
    %9 = vector.broadcast %8 : vector<8x1xf32> to vector<8x128xf32>
    %10 = arith.mulf %7, %9 : vector<8x128xf32>
    %c0_8 = arith.constant 0 : index
    %c0_9 = arith.constant 0 : index
    %11 = vector.load %arg5[%c0_8, %c0_9] : memref<8x1xf32, #tpu.memory_space<vmem>>, vector<8x1xf32>
    %12 = vector.broadcast %11 : vector<8x1xf32> to vector<8x128xf32>
    %13 = arith.addf %10, %12 : vector<8x128xf32>
    %c0_10 = arith.constant 0 : index
    %c0_11 = arith.constant 0 : index
    %14 = vector.load %arg6[%c0_10, %c0_11] : memref<16x8xf32, #tpu.memory_space<vmem>>, vector<16x8xf32>
    %cst_12 = arith.constant dense<0.000000e+00> : vector<16x128xf32>
    %15 = tpu.matmul %14, %13, %cst_12 {dimension_numbers = #tpu.dot_dimension_numbers<[1], [0], [0], [1], [0, 0, 1, 1], [], []>, precision = #tpu.contract_precision<fp32>} : vector<16x8xf32>, vector<8x128xf32>, vector<16x128xf32> -> vector<16x128xf32>
    %c0_13 = arith.constant 0 : index
    %c0_14 = arith.constant 0 : index
    %16 = vector.load %arg7[%c0_13, %c0_14] : memref<16x1xf32, #tpu.memory_space<vmem>>, vector<16x1xf32>
    %17 = vector.broadcast %16 : vector<16x1xf32> to vector<16x128xf32>
    %18 = arith.addf %15, %17 : vector<16x128xf32>
    %cst_15 = arith.constant 0.000000e+00 : f32
    %19 = vector.broadcast %cst_15 : f32 to vector<16x128xf32>
    %20 = arith.maximumf %18, %19 : vector<16x128xf32>
    %21 = tpu.transpose %20, [1, 0] : vector<16x128xf32> -> vector<128x16xf32>
    %22 = vector.extract_strided_slice %21 {offsets = [0, 0], sizes = [128, 12], strides = [1, 1]} : vector<128x16xf32> to vector<128x12xf32>
    %c0_16 = arith.constant 0 : index
    %c0_17 = arith.constant 0 : index
    %23 = vector.load %arg8[%c0_16, %c0_17] : memref<128x12xf32, #tpu.memory_space<vmem>>, vector<128x12xf32>
    tpu.vector_store %arg8[%c0_16, %c0_17], %22 {strides = array<i32>} : memref<128x12xf32, #tpu.memory_space<vmem>>, vector<128x12xf32>,
    return
  }
  func.func @transform_0(%arg0: i32) -> (i32, i32) {
    %c0_i32 = arith.constant 0 : i32
    %c0_i32_0 = arith.constant 0 : i32
    return %c0_i32, %arg0 : i32, i32
  }
  func.func @transform_1(%arg0: i32) -> (i32, i32) {
    %c0_i32 = arith.constant 0 : i32
    %c0_i32_0 = arith.constant 0 : i32
    %c0_i32_1 = arith.constant 0 : i32
    return %c0_i32, %c0_i32_0 : i32, i32
  }
  func.func @transform_2(%arg0: i32) -> (i32, i32) {
    %c0_i32 = arith.constant 0 : i32
    %c0_i32_0 = arith.constant 0 : i32
    %c0_i32_1 = arith.constant 0 : i32
    return %c0_i32, %c0_i32_0 : i32, i32
  }
  func.func @transform_3(%arg0: i32) -> (i32, i32) {
    %c0_i32 = arith.constant 0 : i32
    %c0_i32_0 = arith.constant 0 : i32
    %c0_i32_1 = arith.constant 0 : i32
    return %c0_i32, %c0_i32_0 : i32, i32
  }
  func.func @transform_4(%arg0: i32) -> (i32, i32) {
    %c0_i32 = arith.constant 0 : i32
    %c0_i32_0 = arith.constant 0 : i32
    %c0_i32_1 = arith.constant 0 : i32
    return %c0_i32, %c0_i32_0 : i32, i32
  }
  func.func @transform_5(%arg0: i32) -> (i32, i32) {
    %c0_i32 = arith.constant 0 : i32
    %c0_i32_0 = arith.constant 0 : i32
    %c0_i32_1 = arith.constant 0 : i32
    return %c0_i32, %c0_i32_0 : i32, i32
  }
  func.func @transform_6(%arg0: i32) -> (i32, i32) {
    %c0_i32 = arith.constant 0 : i32
    %c0_i32_0 = arith.constant 0 : i32
    %c0_i32_1 = arith.constant 0 : i32
    return %c0_i32, %c0_i32_0 : i32, i32
  }
  func.func @transform_7(%arg0: i32) -> (i32, i32) {
    %c0_i32 = arith.constant 0 : i32
    %c0_i32_0 = arith.constant 0 : i32
    return %arg0, %c0_i32 : i32, i32
  }
}

</mosaic_0001>

<llo_original>
// kernel: decoder_forward.2
$region0: #{decoder_forward.2}
  #allocation0 [shape = 'u32[]', space=smem, size = 0x4, offset = 0x4, fixed_abs, tag = 'smem constant byte address 0x4 - core index']
  #allocation1 [shape = 'u32[72,128]{1,0:T(1,128)}', space=vmem, size = 0x9000, scoped, tag = 'internal scratch']
  %s0 = inlined_call_operand.vmem [shape: f32[4,128], index: 0, kind: input, shape index: {}]
  %s1 = inlined_call_operand.vmem [shape: f32[8,4], index: 1, kind: input, shape index: {}]
  %s2 = inlined_call_operand.vmem [shape: f32[8,1], index: 2, kind: input, shape index: {}]
  %s3 = inlined_call_operand.vmem [shape: f32[1,8,1], index: 3, kind: output, shape index: {0}]
  %s4 = inlined_call_operand.vmem [shape: f32[1,8,1], index: 4, kind: output, shape index: {1}]
  %5 = xla_tuple %s3, %s4
  %s6 = sld [smem:[#allocation0]]
  $region30: #{decoder_forward.2} parent=0
    _
  %s8 = ssub.s32 1, %s6
  %s9 = scalar_select 0, %s8, %s6
  // Predicated region
  $region2: #{decoder_forward.2} parent=0 // pred_check
    _
  $region3: #{decoder_forward.2} parent=0 // pred_check_branch
    %11 = sbr.rel (0) target = $region5
  $region4: #{decoder_forward.2} parent=0 // pred_region
    _
  $region5: #{decoder_forward.2} parent=0 // pred_fallthru
    _
  // Predicated region
  $region6: #{decoder_forward.2} parent=0 // pred_check
    _
  $region7: #{decoder_forward.2} parent=0 // pred_check_branch
    %13 = sbr.rel (0) target = $region9
  $region8: #{decoder_forward.2} parent=0 // pred_region
    _
  $region9: #{decoder_forward.2} parent=0 // pred_fallthru
    _
  // Predicated region
  $region10: #{decoder_forward.2} parent=0 // pred_check
    _
  $region11: #{decoder_forward.2} parent=0 // pred_check_branch
    %15 = sbr.rel (0) target = $region13
  $region12: #{decoder_forward.2} parent=0 // pred_region
    _
  $region13: #{decoder_forward.2} parent=0 // pred_fallthru
    _
  %v16 = vld [vmem:[%s1] sm:$0xff]
  %v17 = vld [vmem:[%s0] sm:$0xf]
  %v18 = vld [vmem:[%s2] sm:$0xff]
  %20 = vset.pattern.permute.xlu0 0
  %21 = vperm.xlu0 %20, %v18
  %v22 = vpop.permute.xlu0 %21
  %vm24 = vcmask 31744
  %v26 = vsel %vm24, %v16, 0
  %vm28 = vcmask 1043456
  %v30 = vsel %vm28, %v17, 0
  %32 = vmatpush.msra.mxu0 0.0
  %33 = vmatpush.msra.mxu0 0.0
  %34 = vmatpush.msra.mxu0 0.0
  %35 = vmatpush.msra.mxu0 0.0
  %36 = vmatpush.msra.mxu0 0.0
  %37 = vmatpush.msra.mxu0 0.0
  %38 = vmatpush.msra.mxu0 0.0
  %39 = vmatpush.msra.mxu0 0.0
  %40 = vmatpush.msra.mxu0 0.0
  %41 = vmatpush.msra.mxu0 0.0
  %42 = vmatpush.msra.mxu0 0.0
  %43 = vmatpush.msra.mxu0 0.0
  %44 = vmatpush.msra.mxu0 0.0
  %45 = vmatpush.msra.mxu0 0.0
  %46 = vmatpush.msra.mxu0 0.0
  %v47 = vand.u32 %v30, 4294901760
  %48 = vmatpush.msra.mxu0 %v47
  %v49 = vand.u32 %v26, 4294901760
  %v50 = vsub.f32 %v26, %v49
  %v51 = vand.u32 %v50, 4294901760
  %v52 = vsub.f32 %v50, %v51
  %v53 = vand.u32 %v52, 4294901760
  %54 = vmatmul.f32.gmra.mxu0 %v53
  %v55 = vpop.f32.mrf.mxu0
  %v56 = vadd.f32 %v22, %v55
  %57 = vdwg.mxu0
  %58 = vmatpush.msra.mxu0 0.0
  %59 = vmatpush.msra.mxu0 0.0
  %60 = vmatpush.msra.mxu0 0.0
  %61 = vmatpush.msra.mxu0 0.0
  %62 = vmatpush.msra.mxu0 0.0
  %63 = vmatpush.msra.mxu0 0.0
  %64 = vmatpush.msra.mxu0 0.0
  %65 = vmatpush.msra.mxu0 0.0
  %66 = vmatpush.msra.mxu0 0.0
  %67 = vmatpush.msra.mxu0 0.0
  %68 = vmatpush.msra.mxu0 0.0
  %69 = vmatpush.msra.mxu0 0.0
  %70 = vmatpush.msra.mxu0 0.0
  %71 = vmatpush.msra.mxu0 0.0
  %72 = vmatpush.msra.mxu0 0.0
  %v73 = vand.u32 %v30, 4294901760
  %v74 = vsub.f32 %v30, %v73
  %v75 = vand.u32 %v74, 4294901760
  %v76 = vsub.f32 %v74, %v75
  %v77 = vand.u32 %v76, 4294901760
  %78 = vmatpush.msra.mxu0 %v77
  %v79 = vand.u32 %v26, 4294901760
  %80 = vmatmul.f32.gmra.mxu0 %v79
  %v81 = vpop.f32.mrf.mxu0
  %v82 = vadd.f32 %v56, %v81
  %83 = vdwg.mxu0
  %84 = vmatpush.msra.mxu0 0.0
  %85 = vmatpush.msra.mxu0 0.0
  %86 = vmatpush.msra.mxu0 0.0
  %87 = vmatpush.msra.mxu0 0.0
  %88 = vmatpush.msra.mxu0 0.0
  %89 = vmatpush.msra.mxu0 0.0
  %90 = vmatpush.msra.mxu0 0.0
  %91 = vmatpush.msra.mxu0 0.0
  %92 = vmatpush.msra.mxu0 0.0
  %93 = vmatpush.msra.mxu0 0.0
  %94 = vmatpush.msra.mxu0 0.0
  %95 = vmatpush.msra.mxu0 0.0
  %96 = vmatpush.msra.mxu0 0.0
  %97 = vmatpush.msra.mxu0 0.0
  %98 = vmatpush.msra.mxu0 0.0
  %v99 = vand.u32 %v30, 4294901760
  %v100 = vsub.f32 %v30, %v99
  %101 = vmatpush.msra.mxu0 %v100
  %v102 = vand.u32 %v26, 4294901760
  %v103 = vsub.f32 %v26, %v102
  %104 = vmatmul.f32.gmra.mxu0 %v103
  %v105 = vpop.f32.mrf.mxu0
  %v106 = vadd.f32 %v82, %v105
  %107 = vdwg.mxu0
  %108 = vmatpush.msra.mxu0 0.0
  %109 = vmatpush.msra.mxu0 0.0
  %110 = vmatpush.msra.mxu0 0.0
  %111 = vmatpush.msra.mxu0 0.0
  %112 = vmatpush.msra.mxu0 0.0
  %113 = vmatpush.msra.mxu0 0.0
  %114 = vmatpush.msra.mxu0 0.0
  %115 = vmatpush.msra.mxu0 0.0
  %116 = vmatpush.msra.mxu0 0.0
  %117 = vmatpush.msra.mxu0 0.0
  %118 = vmatpush.msra.mxu0 0.0
  %119 = vmatpush.msra.mxu0 0.0
  %120 = vmatpush.msra.mxu0 0.0
  %121 = vmatpush.msra.mxu0 0.0
  %122 = vmatpush.msra.mxu0 0.0
  %v123 = vand.u32 %v30, 4294901760
  %124 = vmatpush.msra.mxu0 %v123
  %v125 = vand.u32 %v26, 4294901760
  %v126 = vsub.f32 %v26, %v125
  %v127 = vand.u32 %v126, 4294901760
  %128 = vmatmul.f32.gmra.mxu0 %v127
  %v129 = vpop.f32.mrf.mxu0
  %v130 = vadd.f32 %v106, %v129
  %131 = vdwg.mxu0
  %132 = vmatpush.msra.mxu0 0.0
  %133 = vmatpush.msra.mxu0 0.0
  %134 = vmatpush.msra.mxu0 0.0
  %135 = vmatpush.msra.mxu0 0.0
  %136 = vmatpush.msra.mxu0 0.0
  %137 = vmatpush.msra.mxu0 0.0
  %138 = vmatpush.msra.mxu0 0.0
  %139 = vmatpush.msra.mxu0 0.0
  %140 = vmatpush.msra.mxu0 0.0
  %141 = vmatpush.msra.mxu0 0.0
  %142 = vmatpush.msra.mxu0 0.0
  %143 = vmatpush.msra.mxu0 0.0
  %144 = vmatpush.msra.mxu0 0.0
  %145 = vmatpush.msra.mxu0 0.0
  %146 = vmatpush.msra.mxu0 0.0
  %v147 = vand.u32 %v30, 4294901760
  %v148 = vsub.f32 %v30, %v147
  %v149 = vand.u32 %v148, 4294901760
  %150 = vmatpush.msra.mxu0 %v149
  %v151 = vand.u32 %v26, 4294901760
  %152 = vmatmul.f32.gmra.mxu0 %v151
  %v153 = vpop.f32.mrf.mxu0
  %v154 = vadd.f32 %v130, %v153
  %155 = vdwg.mxu0
  %156 = vmatpush.msra.mxu0 0.0
  %157 = vmatpush.msra.mxu0 0.0
  %158 = vmatpush.msra.mxu0 0.0
  %159 = vmatpush.msra.mxu0 0.0
  %160 = vmatpush.msra.mxu0 0.0
  %161 = vmatpush.msra.mxu0 0.0
  %162 = vmatpush.msra.mxu0 0.0
  %163 = vmatpush.msra.mxu0 0.0
  %164 = vmatpush.msra.mxu0 0.0
  %165 = vmatpush.msra.mxu0 0.0
  %166 = vmatpush.msra.mxu0 0.0
  %167 = vmatpush.msra.mxu0 0.0
  %168 = vmatpush.msra.mxu0 0.0
  %169 = vmatpush.msra.mxu0 0.0
  %170 = vmatpush.msra.mxu0 0.0
  %v171 = vand.u32 %v30, 4294901760
  %172 = vmatpush.msra.mxu0 %v171
  %v173 = vand.u32 %v26, 4294901760
  %174 = vmatmul.f32.gmra.mxu0 %v173
  %v175 = vpop.f32.mrf.mxu0
  %v176 = vadd.f32 %v154, %v175
  %177 = vdwg.mxu0
  %v178 = vmax.f32 %v176, 0.0
  %179 = vadd.xlane.f32.xlu0 %v178
  %v180 = vpop.xlane.xlu0 %179
  %vm181 = vcmask 7168
  %182 = vst.msk [vmem:[%s3] sm:$0xff] %vm181, %v180
  %v183 = vmul.f32 %v178, %v178
  %184 = vadd.xlane.f32.xlu0 %v183
  %v185 = vpop.xlane.xlu0 %184
  %186 = vst.msk [vmem:[%s4] sm:$0xff] %vm181, %v185
  // Predicated region
  $region14: #{decoder_forward.2} parent=0 // pred_check
    _
  $region15: #{decoder_forward.2} parent=0 // pred_check_branch
    %188 = sbr.rel (0) target = $region17
  $region16: #{decoder_forward.2} parent=0 // pred_region
    _
  $region17: #{decoder_forward.2} parent=0 // pred_fallthru
    _
  // Predicated region
  $region18: #{decoder_forward.2} parent=0 // pred_check
    _
  $region19: #{decoder_forward.2} parent=0 // pred_check_branch
    %190 = sbr.rel (0) target = $region21
  $region20: #{decoder_forward.2} parent=0 // pred_region
    _
  $region21: #{decoder_forward.2} parent=0 // pred_fallthru
    _
  // Predicated region
  $region22: #{decoder_forward.2} parent=0 // pred_check
    _
  $region23: #{decoder_forward.2} parent=0 // pred_check_branch
    %192 = sbr.rel (0) target = $region25
  $region24: #{decoder_forward.2} parent=0 // pred_region
    _
  $region25: #{decoder_forward.2} parent=0 // pred_fallthru
    _
  // Predicated region
  $region26: #{decoder_forward.2} parent=0 // pred_check
    _
  $region27: #{decoder_forward.2} parent=0 // pred_check_branch
    %194 = sbr.rel (0) target = $region29
  $region28: #{decoder_forward.2} parent=0 // pred_region
    _
  $region29: #{decoder_forward.2} parent=0 // pred_fallthru
    _

// kernel: decoder_forward.3
$region0: #{decoder_forward.3}
  #allocation0 [shape = 'u32[]', space=smem, size = 0x4, offset = 0x4, fixed_abs, tag = 'smem constant byte address 0x4 - core index']
  #allocation1 [shape = 'u32[72,128]{1,0:T(1,128)}', space=vmem, size = 0x9000, scoped, tag = 'internal scratch']
  %s0 = inlined_call_operand.vmem [shape: f32[4,128], index: 0, kind: input, shape index: {}]
  %s1 = inlined_call_operand.vmem [shape: f32[8,4], index: 1, kind: input, shape index: {}]
  %s2 = inlined_call_operand.vmem [shape: f32[8,1], index: 2, kind: input, shape index: {}]
  %s3 = inlined_call_operand.vmem [shape: f32[8,1], index: 3, kind: input, shape index: {}]
  %s4 = inlined_call_operand.vmem [shape: f32[8,1], index: 4, kind: input, shape index: {}]
  %s5 = inlined_call_operand.vmem [shape: f32[16,8], index: 5, kind: input, shape index: {}]
  %s6 = inlined_call_operand.vmem [shape: f32[16,1], index: 6, kind: input, shape index: {}]
  %s7 = inlined_call_operand.vmem [shape: f32[128,12], index: 7, kind: output, shape index: {}]
  %s8 = sld [smem:[#allocation0]]
  $region38: #{decoder_forward.3} parent=0
    _
  %s10 = ssub.s32 1, %s8
  %s11 = scalar_select 0, %s10, %s8
  // Predicated region
  $region2: #{decoder_forward.3} parent=0 // pred_check
    _
  $region3: #{decoder_forward.3} parent=0 // pred_check_branch
    %13 = sbr.rel (0) target = $region5
  $region4: #{decoder_forward.3} parent=0 // pred_region
    _
  $region5: #{decoder_forward.3} parent=0 // pred_fallthru
    _
  // Predicated region
  $region6: #{decoder_forward.3} parent=0 // pred_check
    _
  $region7: #{decoder_forward.3} parent=0 // pred_check_branch
    %15 = sbr.rel (0) target = $region9
  $region8: #{decoder_forward.3} parent=0 // pred_region
    _
  $region9: #{decoder_forward.3} parent=0 // pred_fallthru
    _
  // Predicated region
  $region10: #{decoder_forward.3} parent=0 // pred_check
    _
  $region11: #{decoder_forward.3} parent=0 // pred_check_branch
    %17 = sbr.rel (0) target = $region13
  $region12: #{decoder_forward.3} parent=0 // pred_region
    _
  $region13: #{decoder_forward.3} parent=0 // pred_fallthru
    _
  // Predicated region
  $region14: #{decoder_forward.3} parent=0 // pred_check
    _
  $region15: #{decoder_forward.3} parent=0 // pred_check_branch
    %19 = sbr.rel (0) target = $region17
  $region16: #{decoder_forward.3} parent=0 // pred_region
    _
  $region17: #{decoder_forward.3} parent=0 // pred_fallthru
    _
  // Predicated region
  $region18: #{decoder_forward.3} parent=0 // pred_check
    _
  $region19: #{decoder_forward.3} parent=0 // pred_check_branch
    %21 = sbr.rel (0) target = $region21
  $region20: #{decoder_forward.3} parent=0 // pred_region
    _
  $region21: #{decoder_forward.3} parent=0 // pred_fallthru
    _
  // Predicated region
  $region22: #{decoder_forward.3} parent=0 // pred_check
    _
  $region23: #{decoder_forward.3} parent=0 // pred_check_branch
    %23 = sbr.rel (0) target = $region25
  $region24: #{decoder_forward.3} parent=0 // pred_region
    _
  $region25: #{decoder_forward.3} parent=0 // pred_fallthru
    _
  // Predicated region
  $region26: #{decoder_forward.3} parent=0 // pred_check
    _
  $region27: #{decoder_forward.3} parent=0 // pred_check_branch
    %25 = sbr.rel (0) target = $region29
  $region28: #{decoder_forward.3} parent=0 // pred_region
    _
  $region29: #{decoder_forward.3} parent=0 // pred_fallthru
    _
  %v26 = vld [vmem:[%s1] sm:$0xff]
  %v27 = vld [vmem:[%s0] sm:$0xf]
  %v28 = vld [vmem:[%s2] sm:$0xff]
  %30 = vset.pattern.permute.xlu0 0
  %31 = vperm.xlu0 %30, %v28
  %v32 = vpop.permute.xlu0 %31
  %vm34 = vcmask 31744
  %v36 = vsel %vm34, %v26, 0
  %vm38 = vcmask 1043456
  %v40 = vsel %vm38, %v27, 0
  %42 = vmatpush.msra.mxu0 0.0
  %43 = vmatpush.msra.mxu0 0.0
  %44 = vmatpush.msra.mxu0 0.0
  %45 = vmatpush.msra.mxu0 0.0
  %46 = vmatpush.msra.mxu0 0.0
  %47 = vmatpush.msra.mxu0 0.0
  %48 = vmatpush.msra.mxu0 0.0
  %49 = vmatpush.msra.mxu0 0.0
  %50 = vmatpush.msra.mxu0 0.0
  %51 = vmatpush.msra.mxu0 0.0
  %52 = vmatpush.msra.mxu0 0.0
  %53 = vmatpush.msra.mxu0 0.0
  %54 = vmatpush.msra.mxu0 0.0
  %55 = vmatpush.msra.mxu0 0.0
  %56 = vmatpush.msra.mxu0 0.0
  %v57 = vand.u32 %v40, 4294901760
  %58 = vmatpush.msra.mxu0 %v57
  %v59 = vand.u32 %v36, 4294901760
  %v60 = vsub.f32 %v36, %v59
  %v61 = vand.u32 %v60, 4294901760
  %v62 = vsub.f32 %v60, %v61
  %v63 = vand.u32 %v62, 4294901760
  %64 = vmatmul.f32.gmra.mxu0 %v63
  %v65 = vpop.f32.mrf.mxu0
  %v66 = vadd.f32 %v32, %v65
  %67 = vdwg.mxu0
  %68 = vmatpush.msra.mxu0 0.0
  %69 = vmatpush.msra.mxu0 0.0
  %70 = vmatpush.msra.mxu0 0.0
  %71 = vmatpush.msra.mxu0 0.0
  %72 = vmatpush.msra.mxu0 0.0
  %73 = vmatpush.msra.mxu0 0.0
  %74 = vmatpush.msra.mxu0 0.0
  %75 = vmatpush.msra.mxu0 0.0
  %76 = vmatpush.msra.mxu0 0.0
  %77 = vmatpush.msra.mxu0 0.0
  %78 = vmatpush.msra.mxu0 0.0
  %79 = vmatpush.msra.mxu0 0.0
  %80 = vmatpush.msra.mxu0 0.0
  %81 = vmatpush.msra.mxu0 0.0
  %82 = vmatpush.msra.mxu0 0.0
  %v83 = vand.u32 %v40, 4294901760
  %v84 = vsub.f32 %v40, %v83
  %v85 = vand.u32 %v84, 4294901760
  %v86 = vsub.f32 %v84, %v85
  %v87 = vand.u32 %v86, 4294901760
  %88 = vmatpush.msra.mxu0 %v87
  %v89 = vand.u32 %v36, 4294901760
  %90 = vmatmul.f32.gmra.mxu0 %v89
  %v91 = vpop.f32.mrf.mxu0
  %v92 = vadd.f32 %v66, %v91
  %93 = vdwg.mxu0
  %94 = vmatpush.msra.mxu0 0.0
  %95 = vmatpush.msra.mxu0 0.0
  %96 = vmatpush.msra.mxu0 0.0
  %97 = vmatpush.msra.mxu0 0.0
  %98 = vmatpush.msra.mxu0 0.0
  %99 = vmatpush.msra.mxu0 0.0
  %100 = vmatpush.msra.mxu0 0.0
  %101 = vmatpush.msra.mxu0 0.0
  %102 = vmatpush.msra.mxu0 0.0
  %103 = vmatpush.msra.mxu0 0.0
  %104 = vmatpush.msra.mxu0 0.0
  %105 = vmatpush.msra.mxu0 0.0
  %106 = vmatpush.msra.mxu0 0.0
  %107 = vmatpush.msra.mxu0 0.0
  %108 = vmatpush.msra.mxu0 0.0
  %v109 = vand.u32 %v40, 4294901760
  %v110 = vsub.f32 %v40, %v109
  %111 = vmatpush.msra.mxu0 %v110
  %v112 = vand.u32 %v36, 4294901760
  %v113 = vsub.f32 %v36, %v112
  %114 = vmatmul.f32.gmra.mxu0 %v113
  %v115 = vpop.f32.mrf.mxu0
  %v116 = vadd.f32 %v92, %v115
  %117 = vdwg.mxu0
  %118 = vmatpush.msra.mxu0 0.0
  %119 = vmatpush.msra.mxu0 0.0
  %120 = vmatpush.msra.mxu0 0.0
  %121 = vmatpush.msra.mxu0 0.0
  %122 = vmatpush.msra.mxu0 0.0
  %123 = vmatpush.msra.mxu0 0.0
  %124 = vmatpush.msra.mxu0 0.0
  %125 = vmatpush.msra.mxu0 0.0
  %126 = vmatpush.msra.mxu0 0.0
  %127 = vmatpush.msra.mxu0 0.0
  %128 = vmatpush.msra.mxu0 0.0
  %129 = vmatpush.msra.mxu0 0.0
  %130 = vmatpush.msra.mxu0 0.0
  %131 = vmatpush.msra.mxu0 0.0
  %132 = vmatpush.msra.mxu0 0.0
  %v133 = vand.u32 %v40, 4294901760
  %134 = vmatpush.msra.mxu0 %v133
  %v135 = vand.u32 %v36, 4294901760
  %v136 = vsub.f32 %v36, %v135
  %v137 = vand.u32 %v136, 4294901760
  %138 = vmatmul.f32.gmra.mxu0 %v137
  %v139 = vpop.f32.mrf.mxu0
  %v140 = vadd.f32 %v116, %v139
  %141 = vdwg.mxu0
  %142 = vmatpush.msra.mxu0 0.0
  %143 = vmatpush.msra.mxu0 0.0
  %144 = vmatpush.msra.mxu0 0.0
  %145 = vmatpush.msra.mxu0 0.0
  %146 = vmatpush.msra.mxu0 0.0
  %147 = vmatpush.msra.mxu0 0.0
  %148 = vmatpush.msra.mxu0 0.0
  %149 = vmatpush.msra.mxu0 0.0
  %150 = vmatpush.msra.mxu0 0.0
  %151 = vmatpush.msra.mxu0 0.0
  %152 = vmatpush.msra.mxu0 0.0
  %153 = vmatpush.msra.mxu0 0.0
  %154 = vmatpush.msra.mxu0 0.0
  %155 = vmatpush.msra.mxu0 0.0
  %156 = vmatpush.msra.mxu0 0.0
  %v157 = vand.u32 %v40, 4294901760
  %v158 = vsub.f32 %v40, %v157
  %v159 = vand.u32 %v158, 4294901760
  %160 = vmatpush.msra.mxu0 %v159
  %v161 = vand.u32 %v36, 4294901760
  %162 = vmatmul.f32.gmra.mxu0 %v161
  %v163 = vpop.f32.mrf.mxu0
  %v164 = vadd.f32 %v140, %v163
  %165 = vdwg.mxu0
  %166 = vmatpush.msra.mxu0 0.0
  %167 = vmatpush.msra.mxu0 0.0
  %168 = vmatpush.msra.mxu0 0.0
  %169 = vmatpush.msra.mxu0 0.0
  %170 = vmatpush.msra.mxu0 0.0
  %171 = vmatpush.msra.mxu0 0.0
  %172 = vmatpush.msra.mxu0 0.0
  %173 = vmatpush.msra.mxu0 0.0
  %174 = vmatpush.msra.mxu0 0.0
  %175 = vmatpush.msra.mxu0 0.0
  %176 = vmatpush.msra.mxu0 0.0
  %177 = vmatpush.msra.mxu0 0.0
  %178 = vmatpush.msra.mxu0 0.0
  %179 = vmatpush.msra.mxu0 0.0
  %180 = vmatpush.msra.mxu0 0.0
  %v181 = vand.u32 %v40, 4294901760
  %182 = vmatpush.msra.mxu0 %v181
  %v183 = vand.u32 %v36, 4294901760
  %184 = vmatmul.f32.gmra.mxu0 %v183
  %v185 = vpop.f32.mrf.mxu0
  %v186 = vadd.f32 %v164, %v185
  %187 = vdwg.mxu0
  %v188 = vmax.f32 %v186, 0.0
  %v189 = vld [vmem:[%s3] sm:$0xff]
  %191 = vset.pattern.permute.xlu0 0
  %192 = vperm.xlu0 %191, %v189
  %v193 = vpop.permute.xlu0 %192
  %v195 = vmul.f32 %v188, %v193
  %v196 = vld [vmem:[%s4] sm:$0xff]
  %198 = vset.pattern.permute.xlu0 0
  %199 = vperm.xlu0 %198, %v196
  %v200 = vpop.permute.xlu0 %199
  %v202 = vadd.f32 %v195, %v200
  %v203 = vld [vmem:[%s5] sm:$0xff]
  %v204 = vld [vmem:[%s5 + $0x8] sm:$0xff]
  %v205 = vld [vmem:[%s6] sm:$0xff]
  %v206 = vld [vmem:[%s6 + $0x8] sm:$0xff]
  %208 = vset.pattern.permute.xlu0 0
  %209 = vperm.xlu0 %208, %v205
  %v210 = vpop.permute.xlu0 %209
  %213 = vset.pattern.permute.xlu0 0
  %214 = vperm.xlu0 %213, %v206
  %v215 = vpop.permute.xlu0 %214
  %vm217 = vcmask 64512
  %v219 = vsel %vm217, %v203, 0
  %v222 = vsel %vm217, %v204, 0
  %224 = vmatpush.msra.mxu0 0.0
  %225 = vmatpush.msra.mxu0 0.0
  %226 = vmatpush.msra.mxu0 0.0
  %227 = vmatpush.msra.mxu0 0.0
  %228 = vmatpush.msra.mxu0 0.0
  %229 = vmatpush.msra.mxu0 0.0
  %230 = vmatpush.msra.mxu0 0.0
  %231 = vmatpush.msra.mxu0 0.0
  %232 = vmatpush.msra.mxu0 0.0
  %233 = vmatpush.msra.mxu0 0.0
  %234 = vmatpush.msra.mxu0 0.0
  %235 = vmatpush.msra.mxu0 0.0
  %236 = vmatpush.msra.mxu0 0.0
  %237 = vmatpush.msra.mxu0 0.0
  %238 = vmatpush.msra.mxu0 0.0
  %v239 = vand.u32 %v202, 4294901760
  %240 = vmatpush.msra.mxu0 %v239
  %v241 = vand.u32 %v219, 4294901760
  %v242 = vsub.f32 %v219, %v241
  %v243 = vand.u32 %v242, 4294901760
  %v244 = vsub.f32 %v242, %v243
  %v245 = vand.u32 %v244, 4294901760
  %246 = vmatmul.f32.gmra.mxu0 %v245
  %v247 = vpop.f32.mrf.mxu0
  %v248 = vadd.f32 %v210, %v247
  %v249 = vand.u32 %v222, 4294901760
  %v250 = vsub.f32 %v222, %v249
  %v251 = vand.u32 %v250, 4294901760
  %v252 = vsub.f32 %v250, %v251
  %v253 = vand.u32 %v252, 4294901760
  %254 = vmatmul.f32.gmra.mxu0 %v253
  %v255 = vpop.f32.mrf.mxu0
  %v256 = vadd.f32 %v215, %v255
  %257 = vdwg.mxu0
  %258 = vmatpush.msra.mxu0 0.0
  %259 = vmatpush.msra.mxu0 0.0
  %260 = vmatpush.msra.mxu0 0.0
  %261 = vmatpush.msra.mxu0 0.0
  %262 = vmatpush.msra.mxu0 0.0
  %263 = vmatpush.msra.mxu0 0.0
  %264 = vmatpush.msra.mxu0 0.0
  %265 = vmatpush.msra.mxu0 0.0
  %266 = vmatpush.msra.mxu0 0.0
  %267 = vmatpush.msra.mxu0 0.0
  %268 = vmatpush.msra.mxu0 0.0
  %269 = vmatpush.msra.mxu0 0.0
  %270 = vmatpush.msra.mxu0 0.0
  %271 = vmatpush.msra.mxu0 0.0
  %272 = vmatpush.msra.mxu0 0.0
  %v273 = vand.u32 %v202, 4294901760
  %v274 = vsub.f32 %v202, %v273
  %v275 = vand.u32 %v274, 4294901760
  %v276 = vsub.f32 %v274, %v275
  %v277 = vand.u32 %v276, 4294901760
  %278 = vmatpush.msra.mxu0 %v277
  %v279 = vand.u32 %v219, 4294901760
  %280 = vmatmul.f32.gmra.mxu0 %v279
  %v281 = vpop.f32.mrf.mxu0
  %v282 = vadd.f32 %v248, %v281
  %v283 = vand.u32 %v222, 4294901760
  %284 = vmatmul.f32.gmra.mxu0 %v283
  %v285 = vpop.f32.mrf.mxu0
  %v286 = vadd.f32 %v256, %v285
  %287 = vdwg.mxu0
  %288 = vmatpush.msra.mxu0 0.0
  %289 = vmatpush.msra.mxu0 0.0
  %290 = vmatpush.msra.mxu0 0.0
  %291 = vmatpush.msra.mxu0 0.0
  %292 = vmatpush.msra.mxu0 0.0
  %293 = vmatpush.msra.mxu0 0.0
  %294 = vmatpush.msra.mxu0 0.0
  %295 = vmatpush.msra.mxu0 0.0
  %296 = vmatpush.msra.mxu0 0.0
  %297 = vmatpush.msra.mxu0 0.0
  %298 = vmatpush.msra.mxu0 0.0
  %299 = vmatpush.msra.mxu0 0.0
  %300 = vmatpush.msra.mxu0 0.0
  %301 = vmatpush.msra.mxu0 0.0
  %302 = vmatpush.msra.mxu0 0.0
  %v303 = vand.u32 %v202, 4294901760
  %v304 = vsub.f32 %v202, %v303
  %305 = vmatpush.msra.mxu0 %v304
  %v306 = vand.u32 %v219, 4294901760
  %v307 = vsub.f32 %v219, %v306
  %308 = vmatmul.f32.gmra.mxu0 %v307
  %v309 = vpop.f32.mrf.mxu0
  %v310 = vadd.f32 %v282, %v309
  %v311 = vand.u32 %v222, 4294901760
  %v312 = vsub.f32 %v222, %v311
  %313 = vmatmul.f32.gmra.mxu0 %v312
  %v314 = vpop.f32.mrf.mxu0
  %v315 = vadd.f32 %v286, %v314
  %316 = vdwg.mxu0
  %317 = vmatpush.msra.mxu0 0.0
  %318 = vmatpush.msra.mxu0 0.0
  %319 = vmatpush.msra.mxu0 0.0
  %320 = vmatpush.msra.mxu0 0.0
  %321 = vmatpush.msra.mxu0 0.0
  %322 = vmatpush.msra.mxu0 0.0
  %323 = vmatpush.msra.mxu0 0.0
  %324 = vmatpush.msra.mxu0 0.0
  %325 = vmatpush.msra.mxu0 0.0
  %326 = vmatpush.msra.mxu0 0.0
  %327 = vmatpush.msra.mxu0 0.0
  %328 = vmatpush.msra.mxu0 0.0
  %329 = vmatpush.msra.mxu0 0.0
  %330 = vmatpush.msra.mxu0 0.0
  %331 = vmatpush.msra.mxu0 0.0
  %v332 = vand.u32 %v202, 4294901760
  %333 = vmatpush.msra.mxu0 %v332
  %v334 = vand.u32 %v219, 4294901760
  %v335 = vsub.f32 %v219, %v334
  %v336 = vand.u32 %v335, 4294901760
  %337 = vmatmul.f32.gmra.mxu0 %v336
  %v338 = vpop.f32.mrf.mxu0
  %v339 = vadd.f32 %v310, %v338
  %v340 = vand.u32 %v222, 4294901760
  %v341 = vsub.f32 %v222, %v340
  %v342 = vand.u32 %v341, 4294901760
  %343 = vmatmul.f32.gmra.mxu0 %v342
  %v344 = vpop.f32.mrf.mxu0
  %v345 = vadd.f32 %v315, %v344
  %346 = vdwg.mxu0
  %347 = vmatpush.msra.mxu0 0.0
  %348 = vmatpush.msra.mxu0 0.0
  %349 = vmatpush.msra.mxu0 0.0
  %350 = vmatpush.msra.mxu0 0.0
  %351 = vmatpush.msra.mxu0 0.0
  %352 = vmatpush.msra.mxu0 0.0
  %353 = vmatpush.msra.mxu0 0.0
  %354 = vmatpush.msra.mxu0 0.0
  %355 = vmatpush.msra.mxu0 0.0
  %356 = vmatpush.msra.mxu0 0.0
  %357 = vmatpush.msra.mxu0 0.0
  %358 = vmatpush.msra.mxu0 0.0
  %359 = vmatpush.msra.mxu0 0.0
  %360 = vmatpush.msra.mxu0 0.0
  %361 = vmatpush.msra.mxu0 0.0
  %v362 = vand.u32 %v202, 4294901760
  %v363 = vsub.f32 %v202, %v362
  %v364 = vand.u32 %v363, 4294901760
  %365 = vmatpush.msra.mxu0 %v364
  %v366 = vand.u32 %v219, 4294901760
  %367 = vmatmul.f32.gmra.mxu0 %v366
  %v368 = vpop.f32.mrf.mxu0
  %v369 = vadd.f32 %v339, %v368
  %v370 = vand.u32 %v222, 4294901760
  %371 = vmatmul.f32.gmra.mxu0 %v370
  %v372 = vpop.f32.mrf.mxu0
  %v373 = vadd.f32 %v345, %v372
  %374 = vdwg.mxu0
  %375 = vmatpush.msra.mxu0 0.0
  %376 = vmatpush.msra.mxu0 0.0
  %377 = vmatpush.msra.mxu0 0.0
  %378 = vmatpush.msra.mxu0 0.0
  %379 = vmatpush.msra.mxu0 0.0
  %380 = vmatpush.msra.mxu0 0.0
  %381 = vmatpush.msra.mxu0 0.0
  %382 = vmatpush.msra.mxu0 0.0
  %383 = vmatpush.msra.mxu0 0.0
  %384 = vmatpush.msra.mxu0 0.0
  %385 = vmatpush.msra.mxu0 0.0
  %386 = vmatpush.msra.mxu0 0.0
  %387 = vmatpush.msra.mxu0 0.0
  %388 = vmatpush.msra.mxu0 0.0
  %389 = vmatpush.msra.mxu0 0.0
  %v390 = vand.u32 %v202, 4294901760
  %391 = vmatpush.msra.mxu0 %v390
  %v392 = vand.u32 %v219, 4294901760
  %393 = vmatmul.f32.gmra.mxu0 %v392
  %v394 = vpop.f32.mrf.mxu0
  %v395 = vadd.f32 %v369, %v394
  %v396 = vand.u32 %v222, 4294901760
  %397 = vmatmul.f32.gmra.mxu0 %v396
  %v398 = vpop.f32.mrf.mxu0
  %v399 = vadd.f32 %v373, %v398
  %400 = vdwg.mxu0
  %v401 = vmax.f32 %v395, 0.0
  %v402 = vmax.f32 %v399, 0.0
  %403 = vxpose.xlu0.b32.start [1/16] %v401, 128
  %404 = vxpose.xlu0.b32.cont [2/16] %v402, 128
  %405 = vxpose.xlu0.b32.cont [3/16] 0.0, 128
  %406 = vxpose.xlu0.b32.cont [4/16] 0.0, 128
  %407 = vxpose.xlu0.b32.cont [5/16] 0.0, 128
  %408 = vxpose.xlu0.b32.cont [6/16] 0.0, 128
  %409 = vxpose.xlu0.b32.cont [7/16] 0.0, 128
  %410 = vxpose.xlu0.b32.cont [8/16] 0.0, 128
  %411 = vxpose.xlu0.b32.cont [9/16] 0.0, 128
  %412 = vxpose.xlu0.b32.cont [10/16] 0.0, 128
  %413 = vxpose.xlu0.b32.cont [11/16] 0.0, 128
  %414 = vxpose.xlu0.b32.cont [12/16] 0.0, 128
  %415 = vxpose.xlu0.b32.cont [13/16] 0.0, 128
  %416 = vxpose.xlu0.b32.cont [14/16] 0.0, 128
  %417 = vxpose.xlu0.b32.cont [15/16] 0.0, 128
  %418 = vxpose.xlu0.b32.end [16/16] 0.0, 128
  %v419 = vpop.trf.xlu0
  %v420 = vpop.trf.xlu0
  %v421 = vpop.trf.xlu0
  %v422 = vpop.trf.xlu0
  %v423 = vpop.trf.xlu0
  %v424 = vpop.trf.xlu0
  %v425 = vpop.trf.xlu0
  %v426 = vpop.trf.xlu0
  %v427 = vpop.trf.xlu0
  %v428 = vpop.trf.xlu0
  %v429 = vpop.trf.xlu0
  %v430 = vpop.trf.xlu0
  %v431 = vpop.trf.xlu0
  %v432 = vpop.trf.xlu0
  %v433 = vpop.trf.xlu0
  %v434 = vpop.trf.xlu0
  %vm435 = vcmask 97280
  %436 = vst.msk [vmem:[%s7] sm:$0xff] %vm435, %v419
  %437 = vst.msk [vmem:[%s7 + $0x8] sm:$0xff] %vm435, %v420
  %438 = vst.msk [vmem:[%s7 + $0x10] sm:$0xff] %vm435, %v421
  %439 = vst.msk [vmem:[%s7 + $0x18] sm:$0xff] %vm435, %v422
  %440 = vst.msk [vmem:[%s7 + $0x20] sm:$0xff] %vm435, %v423
  %441 = vst.msk [vmem:[%s7 + $0x28] sm:$0xff] %vm435, %v424
  %442 = vst.msk [vmem:[%s7 + $0x30] sm:$0xff] %vm435, %v425
  %443 = vst.msk [vmem:[%s7 + $0x38] sm:$0xff] %vm435, %v426
  %444 = vst.msk [vmem:[%s7 + $0x40] sm:$0xff] %vm435, %v427
  %445 = vst.msk [vmem:[%s7 + $0x48] sm:$0xff] %vm435, %v428
  %446 = vst.msk [vmem:[%s7 + $0x50] sm:$0xff] %vm435, %v429
  %447 = vst.msk [vmem:[%s7 + $0x58] sm:$0xff] %vm435, %v430
  %448 = vst.msk [vmem:[%s7 + $0x60] sm:$0xff] %vm435, %v431
  %449 = vst.msk [vmem:[%s7 + $0x68] sm:$0xff] %vm435, %v432
  %450 = vst.msk [vmem:[%s7 + $0x70] sm:$0xff] %vm435, %v433
  %451 = vst.msk [vmem:[%s7 + $0x78] sm:$0xff] %vm435, %v434
  // Predicated region
  $region30: #{decoder_forward.3} parent=0 // pred_check
    _
  $region31: #{decoder_forward.3} parent=0 // pred_check_branch
    %453 = sbr.rel (0) target = $region33
  $region32: #{decoder_forward.3} parent=0 // pred_region
    _
  $region33: #{decoder_forward.3} parent=0 // pred_fallthru
    _
  // Predicated region
  $region34: #{decoder_forward.3} parent=0 // pred_check
    _
  $region35: #{decoder_forward.3} parent=0 // pred_check_branch
    %455 = sbr.rel (0) target = $region37
  $region36: #{decoder_forward.3} parent=0 // pred_region
    _
  $region37: #{decoder_forward.3} parent=0 // pred_fallthru
    _

</llo_original>
